<compile_context>
chip_gen: v5e
topology: v5e:2x2
jax: 0.10.0
libtpu: 0.0.40
codegen_flags: <defaults>
</compile_context>

<pallas_src>
import functools
import math

import jax
import jax.numpy as jnp
from jax.experimental import pallas as pl
from jax.experimental.pallas import tpu as pltpu

# --- synthetic hyper-params (p.* not provided in the source) ---
X_DIM = 256                 # p.NUM_PIXELS
Y_DIM = 10                  # p.NUM_LABELS
Z_DIM = 16                  # p.NUM_STYLE
H_DIMS = (128, 128, 128)    # p.NUM_HIDDEN (equal sizes -> layer chain is consistent)
EPS = 1e-6                  # p.EPS

MAX_TB = 1024               # max batch-row tile (512->1024 ~ 85->86% HBM roofline)


def _round_up(x, m):
    return ((x + m - 1) // m) * m


def _use_bf16_swish():
    """bf16 VPU/EUP exists on v6e/v7x but NOT v5e (or older): gate by generation,
    defaulting to the always-safe f32 path."""
    try:
        kind = jax.devices()[0].device_kind.lower()
    except Exception:
        return False
    return ("v6" in kind) or ("v7" in kind)


BF16_SWISH = _use_bf16_swish()


# ------------------------------- Pallas kernel -------------------------------

def _mlp_kernel(z_ref, y_ref, *refs, eps, bf16_swish):
    """Fused MLP: (zs, ys) -> [Linear+Swish]*(n-1) -> Linear -> ClippedSigmoid.

    refs = (W_z, W_y, b0, W1, b1, ..., W_head, b_head, o_ref).
    Weights are bf16 (MXU operands); accumulation is f32. Swish is bf16 on
    v6e/v7x, f32 on v5e. The head sigmoid + clip stays in f32.
    """
    o_ref = refs[-1]
    wz_ref, wy_ref, b0_ref = refs[0], refs[1], refs[2]
    rest = refs[3:-1]
    n_rest = len(rest) // 2

    def swish(acc_f32):
        # sigmoid goes to the EUP transcendental slot either way.
        if bf16_swish:
            a = acc_f32.astype(jnp.bfloat16)
            return a * jax.nn.sigmoid(a)          # stays bf16; next MXU op wants bf16
        return acc_f32 * jax.nn.sigmoid(acc_f32)

    # Layer 0: fused "concat" -- acc0 = zs @ W_z + ys @ W_y + b0.
    wz = wz_ref[...]
    wy = wy_ref[...]
    acc = (jnp.dot(z_ref[...].astype(wz.dtype), wz,
                   preferred_element_type=jnp.float32)
           + jnp.dot(y_ref[...].astype(wy.dtype), wy,
                     preferred_element_type=jnp.float32)
           + b0_ref[...])
    h = swish(acc)

    # Remaining hidden layers + head.
    for i in range(n_rest):
        w = rest[2 * i][...]
        b = rest[2 * i + 1][...]
        acc = jnp.dot(h.astype(w.dtype), w,
                      preferred_element_type=jnp.float32) + b
        if i < n_rest - 1:
            h = swish(acc)
        else:
            # ClippedSigmoid head in f32 (bf16 would round 1-1e-6 to exactly 1.0).
            h = jnp.clip(jax.nn.sigmoid(acc), eps, 1.0 - eps)
    o_ref[...] = h


# ------------------------------- parameters ----------------------------------

def init_params(key, x_dim=X_DIM, y_dim=Y_DIM, z_dim=Z_DIM, h_dims=H_DIMS):
    """Replicates the module's layer construction (including its indexing quirk)."""
    dims = [(z_dim + y_dim, h_dims[0])]
    for l in range(1, len(h_dims) - 1):
        dims.append((h_dims[l], h_dims[l + 1]))
    dims.append((h_dims[-1], x_dim))

    params = []
    keys = jax.random.split(key, 2 * len(dims))
    for i, (fin, fout) in enumerate(dims):
        bound = 1.0 / math.sqrt(fin)                        # nn.Linear default init
        w = jax.random.uniform(keys[2 * i], (fin, fout), jnp.float32, -bound, bound)
        b = jax.random.uniform(keys[2 * i + 1], (fout,), jnp.float32, -bound, bound)
        params.append((w, b))
    return params


def prepare_params(params, z_dim=Z_DIM):
    """Split layer 0 into (W_z, W_y), pad output dims to lane multiples, cast
    weights to bf16 -- all ONCE, so the wrapper never concats/pads activations.

    Returns a flat list: [W_z, W_y, b0, W1, b1, ..., W_head, b_head].
    """
    w0, b0 = params[0]
    h0, h0p = w0.shape[1], _round_up(w0.shape[1], 128)
    wz = jnp.pad(w0[:z_dim], ((0, 0), (0, h0p - h0))).astype(jnp.bfloat16)
    wy = jnp.pad(w0[z_dim:], ((0, 0), (0, h0p - h0))).astype(jnp.bfloat16)
    b0p = jnp.pad(b0, (0, h0p - h0)).reshape(1, h0p).astype(jnp.float32)
    prepped = [wz, wy, b0p]

    prev = h0p
    for w, b in params[1:]:
        fin, fout = w.shape
        fop = _round_up(fout, 128)
        # Row-pad to the previous layer's padded width (padded h columns are
        # exactly 0, since bias-pad=0 and swish(0)=0), col-pad to lane multiple.
        wp = jnp.pad(w, ((0, prev - fin), (0, fop - fout))).astype(jnp.bfloat16)
        bp = jnp.pad(b, (0, fop - fout)).reshape(1, fop).astype(jnp.float32)
        prepped += [wp, bp]
        prev = fop
    return prepped


# ------------------------------- forward -------------------------------------

@jax.jit
def mlp_decoder_forward(prepped, zs, ys):
    """zs: (B, z_dim), ys: (B, y_dim) -> (B, X_DIM) in one fused Pallas kernel."""
    B = zs.shape[0]
    Xp = prepped[-2].shape[1]

    # Adaptive row tile; split into >=2 grid steps whenever possible so v7x can
    # shard the "parallel" axis across both TensorCores.
    B8 = _round_up(B, 8)
    TB = B8 if B8 <= 8 else min(MAX_TB, _round_up((B8 + 1) // 2, 8))
    Bp = _round_up(B, TB)

    zs_p = zs.astype(jnp.float32)
    ys_p = ys.astype(jnp.float32)
    if Bp != B:
        zs_p = jnp.pad(zs_p, ((0, Bp - B), (0, 0)))
        ys_p = jnp.pad(ys_p, ((0, Bp - B), (0, 0)))

    in_specs = [
        # Last dims (z_dim=16, y_dim=10) are legal: they equal the full array dim.
        pl.BlockSpec((TB, zs.shape[1]), lambda i: (i, 0)),
        pl.BlockSpec((TB, ys.shape[1]), lambda i: (i, 0)),
    ]
    for arr in prepped:
        in_specs.append(pl.BlockSpec(arr.shape, lambda i: (0, 0)))   # resident

    out = pl.pallas_call(
        functools.partial(_mlp_kernel, eps=EPS, bf16_swish=BF16_SWISH),
        out_shape=jax.ShapeDtypeStruct((Bp, Xp), jnp.float32),
        grid=(Bp // TB,),
        in_specs=in_specs,
        out_specs=pl.BlockSpec((TB, Xp), lambda i: (i, 0)),
        compiler_params=pltpu.CompilerParams(
            dimension_semantics=("parallel",),
            vmem_limit_bytes=32 * 1024 * 1024,   # covers big tiles on v5e's 16 MiB default
        ),
    )(zs_p, ys_p, *prepped)

    if Bp == B and Xp == X_DIM:
        return out                               # no trailing HBM copy
    return out[:B, :X_DIM]


# ------------------------------- reference -----------------------------------

def mlp_decoder_ref(params, zs, ys):
    """Pure-JAX mirror of the kernel numerics (bf16 MXU operands, f32 accum,
    generation-gated Swish precision). Relative to the all-f32 PyTorch module
    the expected deviation is O(1e-3), from the bf16 matmul operands."""
    h = jnp.concatenate([zs, ys], axis=-1).astype(jnp.float32)
    n = len(params)
    for i, (w, b) in enumerate(params):
        acc = jnp.dot(h.astype(jnp.bfloat16), w.astype(jnp.bfloat16),
                      preferred_element_type=jnp.float32) + b
        if i < n - 1:
            if BF16_SWISH:
                a = acc.astype(jnp.bfloat16)
                h = (a * jax.nn.sigmoid(a)).astype(jnp.float32)
            else:
                h = acc * jax.nn.sigmoid(acc)
        else:
            h = jnp.clip(jax.nn.sigmoid(acc), EPS, 1.0 - EPS)
    return h


if __name__ == "__main__":
    key = jax.random.PRNGKey(0)
    pkey, zkey, ykey = jax.random.split(key, 3)

    params = init_params(pkey)
    prepped = prepare_params(params)

    B = 2
    zs = jax.random.normal(zkey, (B, Z_DIM), jnp.float32)
    ys = jax.nn.one_hot(jax.random.randint(ykey, (B,), 0, Y_DIM), Y_DIM,
                        dtype=jnp.float32)

    out = jax.block_until_ready(mlp_decoder_forward(prepped, zs, ys))

    assert out.shape == (B, X_DIM), out.shape
    assert bool(jnp.all(jnp.isfinite(out)))
    assert bool(jnp.all((out >= EPS) & (out <= 1.0 - EPS)))

    ref = mlp_decoder_ref(params, zs, ys)
    err = float(jnp.max(jnp.abs(out - ref)))
    assert bool(jnp.allclose(out, ref, atol=5e-3, rtol=5e-3)), err

    print("KERNEL_OK")
</pallas_src>

<mosaic_0001>
module attributes {stable_mosaic.version = 11 : i64} {
  func.func @_mlp_kernel(%arg0: i32, %arg1: memref<8x16xf32, #tpu.memory_space<vmem>>, %arg2: memref<8x10xf32, #tpu.memory_space<vmem>>, %arg3: memref<16x128xbf16, #tpu.memory_space<vmem>>, %arg4: memref<10x128xbf16, #tpu.memory_space<vmem>>, %arg5: memref<1x128xf32, #tpu.memory_space<vmem>>, %arg6: memref<128x128xbf16, #tpu.memory_space<vmem>>, %arg7: memref<1x128xf32, #tpu.memory_space<vmem>>, %arg8: memref<128x256xbf16, #tpu.memory_space<vmem>>, %arg9: memref<1x256xf32, #tpu.memory_space<vmem>>, %arg10: memref<8x256xf32, #tpu.memory_space<vmem>>) attributes {dimension_semantics = [#tpu.dimension_semantics<parallel>], iteration_bounds = array<i64: 1>, scalar_prefetch = 0 : i64, scratch_operands = 0 : i64, tpu.core_type = #tpu.core_type<tc>, window_params = [{transform_indices = @transform_0, window_bounds = array<i64: 8, 16>}, {transform_indices = @transform_1, window_bounds = array<i64: 8, 10>}, {pipeline_mode = #tpu.pipeline_mode<synchronous>, transform_indices = @transform_2, window_bounds = array<i64: 16, 128>}, {pipeline_mode = #tpu.pipeline_mode<synchronous>, transform_indices = @transform_3, window_bounds = array<i64: 10, 128>}, {pipeline_mode = #tpu.pipeline_mode<synchronous>, transform_indices = @transform_4, window_bounds = array<i64: 1, 128>}, {pipeline_mode = #tpu.pipeline_mode<synchronous>, transform_indices = @transform_5, window_bounds = array<i64: 128, 128>}, {pipeline_mode = #tpu.pipeline_mode<synchronous>, transform_indices = @transform_6, window_bounds = array<i64: 1, 128>}, {pipeline_mode = #tpu.pipeline_mode<synchronous>, transform_indices = @transform_7, window_bounds = array<i64: 128, 256>}, {pipeline_mode = #tpu.pipeline_mode<synchronous>, transform_indices = @transform_8, window_bounds = array<i64: 1, 256>}, {transform_indices = @transform_9, window_bounds = array<i64: 8, 256>}]} {
    %c0 = arith.constant 0 : index
    %c0_0 = arith.constant 0 : index
    %0 = vector.load %arg3[%c0, %c0_0] : memref<16x128xbf16, #tpu.memory_space<vmem>>, vector<16x128xbf16>
    %c0_1 = arith.constant 0 : index
    %c0_2 = arith.constant 0 : index
    %1 = vector.load %arg4[%c0_1, %c0_2] : memref<10x128xbf16, #tpu.memory_space<vmem>>, vector<10x128xbf16>
    %c0_3 = arith.constant 0 : index
    %c0_4 = arith.constant 0 : index
    %2 = vector.load %arg1[%c0_3, %c0_4] : memref<8x16xf32, #tpu.memory_space<vmem>>, vector<8x16xf32>
    %3 = arith.truncf %2 : vector<8x16xf32> to vector<8x16xbf16>
    %cst = arith.constant dense<0.000000e+00> : vector<8x128xf32>
    %4 = tpu.matmul %3, %0, %cst {dimension_numbers = #tpu.dot_dimension_numbers<[1], [0], [0], [1], [0, 0, 1, 1], [], []>} : vector<8x16xbf16>, vector<16x128xbf16>, vector<8x128xf32> -> vector<8x128xf32>
    %c0_5 = arith.constant 0 : index
    %c0_6 = arith.constant 0 : index
    %5 = vector.load %arg2[%c0_5, %c0_6] : memref<8x10xf32, #tpu.memory_space<vmem>>, vector<8x10xf32>
    %6 = arith.truncf %5 : vector<8x10xf32> to vector<8x10xbf16>
    %cst_7 = arith.constant dense<0.000000e+00> : vector<8x128xf32>
    %7 = tpu.matmul %6, %1, %cst_7 {dimension_numbers = #tpu.dot_dimension_numbers<[1], [0], [0], [1], [0, 0, 1, 1], [], []>} : vector<8x10xbf16>, vector<10x128xbf16>, vector<8x128xf32> -> vector<8x128xf32>
    %8 = arith.addf %4, %7 : vector<8x128xf32>
    %c0_8 = arith.constant 0 : index
    %c0_9 = arith.constant 0 : index
    %9 = vector.load %arg5[%c0_8, %c0_9] : memref<1x128xf32, #tpu.memory_space<vmem>>, vector<1x128xf32>
    %10 = vector.broadcast %9 : vector<1x128xf32> to vector<8x128xf32>
    %11 = arith.addf %8, %10 : vector<8x128xf32>
    %12 = arith.negf %11 : vector<8x128xf32>
    %13 = math.exp %12 : vector<8x128xf32>
    %cst_10 = arith.constant 1.000000e+00 : f32
    %14 = vector.broadcast %cst_10 : f32 to vector<8x128xf32>
    %15 = arith.addf %14, %13 : vector<8x128xf32>
    %16 = arith.divf %14, %15 : vector<8x128xf32>
    %17 = arith.mulf %11, %16 : vector<8x128xf32>
    %c0_11 = arith.constant 0 : index
    %c0_12 = arith.constant 0 : index
    %18 = vector.load %arg6[%c0_11, %c0_12] : memref<128x128xbf16, #tpu.memory_space<vmem>>, vector<128x128xbf16>
    %c0_13 = arith.constant 0 : index
    %c0_14 = arith.constant 0 : index
    %19 = vector.load %arg7[%c0_13, %c0_14] : memref<1x128xf32, #tpu.memory_space<vmem>>, vector<1x128xf32>
    %20 = arith.truncf %17 : vector<8x128xf32> to vector<8x128xbf16>
    %cst_15 = arith.constant dense<0.000000e+00> : vector<8x128xf32>
    %21 = tpu.matmul %20, %18, %cst_15 {dimension_numbers = #tpu.dot_dimension_numbers<[1], [0], [0], [1], [0, 0, 1, 1], [], []>} : vector<8x128xbf16>, vector<128x128xbf16>, vector<8x128xf32> -> vector<8x128xf32>
    %22 = vector.broadcast %19 : vector<1x128xf32> to vector<8x128xf32>
    %23 = arith.addf %21, %22 : vector<8x128xf32>
    %24 = arith.negf %23 : vector<8x128xf32>
    %25 = math.exp %24 : vector<8x128xf32>
    %cst_16 = arith.constant 1.000000e+00 : f32
    %26 = vector.broadcast %cst_16 : f32 to vector<8x128xf32>
    %27 = arith.addf %26, %25 : vector<8x128xf32>
    %28 = arith.divf %26, %27 : vector<8x128xf32>
    %29 = arith.mulf %23, %28 : vector<8x128xf32>
    %c0_17 = arith.constant 0 : index
    %c0_18 = arith.constant 0 : index
    %30 = vector.load %arg8[%c0_17, %c0_18] : memref<128x256xbf16, #tpu.memory_space<vmem>>, vector<128x256xbf16>
    %c0_19 = arith.constant 0 : index
    %c0_20 = arith.constant 0 : index
    %31 = vector.load %arg9[%c0_19, %c0_20] : memref<1x256xf32, #tpu.memory_space<vmem>>, vector<1x256xf32>
    %32 = arith.truncf %29 : vector<8x128xf32> to vector<8x128xbf16>
    %cst_21 = arith.constant dense<0.000000e+00> : vector<8x256xf32>
    %33 = tpu.matmul %32, %30, %cst_21 {dimension_numbers = #tpu.dot_dimension_numbers<[1], [0], [0], [1], [0, 0, 1, 1], [], []>} : vector<8x128xbf16>, vector<128x256xbf16>, vector<8x256xf32> -> vector<8x256xf32>
    %34 = vector.broadcast %31 : vector<1x256xf32> to vector<8x256xf32>
    %35 = arith.addf %33, %34 : vector<8x256xf32>
    %36 = arith.negf %35 : vector<8x256xf32>
    %37 = math.exp %36 : vector<8x256xf32>
    %cst_22 = arith.constant 1.000000e+00 : f32
    %38 = vector.broadcast %cst_22 : f32 to vector<8x256xf32>
    %39 = arith.addf %38, %37 : vector<8x256xf32>
    %40 = arith.divf %38, %39 : vector<8x256xf32>
    %cst_23 = arith.constant 9.99999997E-7 : f32
    %cst_24 = arith.constant 0.999998986 : f32
    %41 = vector.broadcast %cst_23 : f32 to vector<8x256xf32>
    %42 = arith.maximumf %41, %40 : vector<8x256xf32>
    %43 = vector.broadcast %cst_24 : f32 to vector<8x256xf32>
    %44 = arith.minimumf %43, %42 : vector<8x256xf32>
    %c0_25 = arith.constant 0 : index
    %c0_26 = arith.constant 0 : index
    %45 = vector.load %arg10[%c0_25, %c0_26] : memref<8x256xf32, #tpu.memory_space<vmem>>, vector<8x256xf32>
    tpu.vector_store %arg10[%c0_25, %c0_26], %44 {strides = array<i32>} : memref<8x256xf32, #tpu.memory_space<vmem>>, vector<8x256xf32>,
    return
  }
  func.func @transform_0(%arg0: i32) -> (i32, i32) {
    %c0_i32 = arith.constant 0 : i32
    %c0_i32_0 = arith.constant 0 : i32
    return %arg0, %c0_i32 : i32, i32
  }
  func.func @transform_1(%arg0: i32) -> (i32, i32) {
    %c0_i32 = arith.constant 0 : i32
    %c0_i32_0 = arith.constant 0 : i32
    return %arg0, %c0_i32 : i32, i32
  }
  func.func @transform_2(%arg0: i32) -> (i32, i32) {
    %c0_i32 = arith.constant 0 : i32
    %c0_i32_0 = arith.constant 0 : i32
    %c0_i32_1 = arith.constant 0 : i32
    return %c0_i32, %c0_i32_0 : i32, i32
  }
  func.func @transform_3(%arg0: i32) -> (i32, i32) {
    %c0_i32 = arith.constant 0 : i32
    %c0_i32_0 = arith.constant 0 : i32
    %c0_i32_1 = arith.constant 0 : i32
    return %c0_i32, %c0_i32_0 : i32, i32
  }
  func.func @transform_4(%arg0: i32) -> (i32, i32) {
    %c0_i32 = arith.constant 0 : i32
    %c0_i32_0 = arith.constant 0 : i32
    %c0_i32_1 = arith.constant 0 : i32
    return %c0_i32, %c0_i32_0 : i32, i32
  }
  func.func @transform_5(%arg0: i32) -> (i32, i32) {
    %c0_i32 = arith.constant 0 : i32
    %c0_i32_0 = arith.constant 0 : i32
    %c0_i32_1 = arith.constant 0 : i32
    return %c0_i32, %c0_i32_0 : i32, i32
  }
  func.func @transform_6(%arg0: i32) -> (i32, i32) {
    %c0_i32 = arith.constant 0 : i32
    %c0_i32_0 = arith.constant 0 : i32
    %c0_i32_1 = arith.constant 0 : i32
    return %c0_i32, %c0_i32_0 : i32, i32
  }
  func.func @transform_7(%arg0: i32) -> (i32, i32) {
    %c0_i32 = arith.constant 0 : i32
    %c0_i32_0 = arith.constant 0 : i32
    %c0_i32_1 = arith.constant 0 : i32
    return %c0_i32, %c0_i32_0 : i32, i32
  }
  func.func @transform_8(%arg0: i32) -> (i32, i32) {
    %c0_i32 = arith.constant 0 : i32
    %c0_i32_0 = arith.constant 0 : i32
    %c0_i32_1 = arith.constant 0 : i32
    return %c0_i32, %c0_i32_0 : i32, i32
  }
  func.func @transform_9(%arg0: i32) -> (i32, i32) {
    %c0_i32 = arith.constant 0 : i32
    %c0_i32_0 = arith.constant 0 : i32
    return %arg0, %c0_i32 : i32, i32
  }
}

</mosaic_0001>

<llo_original>
// kernel: mlp_decoder_forward.1
$region0: #{mlp_decoder_forward.1}
  #allocation0 [shape = 'u32[]', space=smem, size = 0x4, offset = 0x4, fixed_abs, tag = 'smem constant byte address 0x4 - core index']
  #allocation1 [shape = 'u32[72,128]{1,0:T(1,128)}', space=vmem, size = 0x9000, scoped, tag = 'internal scratch']
  %s0 = inlined_call_operand.vmem [shape: f32[8,16], index: 0, kind: input, shape index: {}]
  %s1 = inlined_call_operand.vmem [shape: f32[8,10], index: 1, kind: input, shape index: {}]
  %s2 = inlined_call_operand.vmem [shape: bf16[16,128], index: 2, kind: input, shape index: {}]
  %s3 = inlined_call_operand.vmem [shape: bf16[10,128], index: 3, kind: input, shape index: {}]
  %s4 = inlined_call_operand.vmem [shape: f32[1,128], index: 4, kind: input, shape index: {}]
  %s5 = inlined_call_operand.hbm [shape: bf16[128,128], index: 5, kind: input, shape index: {}]
  %s6 = inlined_call_operand.vmem [shape: f32[1,128], index: 6, kind: input, shape index: {}]
  %s7 = inlined_call_operand.hbm [shape: bf16[128,256], index: 7, kind: input, shape index: {}]
  %s8 = inlined_call_operand.vmem [shape: f32[1,256], index: 8, kind: input, shape index: {}]
  %s9 = inlined_call_operand.vmem [shape: f32[8,256], index: 9, kind: output, shape index: {}]
  %s10 = sld [smem:[#allocation0]]
  $region54: #{mlp_decoder_forward.1} parent=0
    _
  %s12 = ssub.s32 1, %s10
  %s13 = scalar_select 0, %s12, %s10
  $region1: #{mlp_decoder_forward.1} parent=0
    #allocation2 [shape = 'u8[32768]{0}', space=vmem, size = 0x8000, scoped, tag = 'input window, operand 5, single buffered']
    #allocation3 [shape = 's32[1]{0}', space=sflag, size = 0x4, scoped, tag = 'scoped memory for mlp_decoder_forward.1']
    #allocation4 [shape = 'u8[65536]{0}', space=vmem, size = 0x10000, scoped, tag = 'input window, operand 7, single buffered']
    #allocation5 [shape = 's32[1]{0}', space=sflag, size = 0x4, scoped, tag = 'scoped memory for mlp_decoder_forward.1']
    %14 = vsyncpa [#allocation3], 0
    %15 = vsyncpa [#allocation5], 0
    // Predicated region
    $region2: #{mlp_decoder_forward.1} parent=1 // pred_check
      _
    $region3: #{mlp_decoder_forward.1} parent=1 // pred_check_branch
      %17 = sbr.rel (0) target = $region5
    $region4: #{mlp_decoder_forward.1} parent=1 // pred_region
      _
    $region5: #{mlp_decoder_forward.1} parent=1 // pred_fallthru
      _
    // Predicated region
    $region6: #{mlp_decoder_forward.1} parent=1 // pred_check
      _
    $region7: #{mlp_decoder_forward.1} parent=1 // pred_check_branch
      %19 = sbr.rel (0) target = $region9
    $region8: #{mlp_decoder_forward.1} parent=1 // pred_region
      _
    $region9: #{mlp_decoder_forward.1} parent=1 // pred_fallthru
      _
    // Predicated region
    $region10: #{mlp_decoder_forward.1} parent=1 // pred_check
      _
    $region11: #{mlp_decoder_forward.1} parent=1 // pred_check_branch
      %21 = sbr.rel (0) target = $region13
    $region12: #{mlp_decoder_forward.1} parent=1 // pred_region
      _
    $region13: #{mlp_decoder_forward.1} parent=1 // pred_fallthru
      _
    // Predicated region
    $region14: #{mlp_decoder_forward.1} parent=1 // pred_check
      _
    $region15: #{mlp_decoder_forward.1} parent=1 // pred_check_branch
      %23 = sbr.rel (0) target = $region17
    $region16: #{mlp_decoder_forward.1} parent=1 // pred_region
      _
    $region17: #{mlp_decoder_forward.1} parent=1 // pred_fallthru
      _
    // Predicated region
    $region18: #{mlp_decoder_forward.1} parent=1 // pred_check
      _
    $region19: #{mlp_decoder_forward.1} parent=1 // pred_check_branch
      %25 = sbr.rel (0) target = $region21
    $region20: #{mlp_decoder_forward.1} parent=1 // pred_region
      _
    $region21: #{mlp_decoder_forward.1} parent=1 // pred_fallthru
      _
    // Predicated region
    $region22: #{mlp_decoder_forward.1} parent=1 // pred_check
      _
    $region23: #{mlp_decoder_forward.1} parent=1 // pred_check_branch
      %27 = sbr.rel (0) target = $region25
    $region24: #{mlp_decoder_forward.1} parent=1 // pred_region
      %29 = vsyncadd [#allocation3], 0
      %s30 = sshll.u32 %s5, 4
      %s31 = int_to_ptr.hbm [resolvable:$true] %s30
      %s32 = sshll.u32 [#allocation2], 4
      %s33 = int_to_ptr.vmem [resolvable:$true] %s32
      %38 = dma.hbm_to_vmem [thread:$0]  %s31, 1024, %s33, [#allocation3], 64, 64, 4
    $region25: #{mlp_decoder_forward.1} parent=1 // pred_fallthru
      _
    // Predicated region
    $region26: #{mlp_decoder_forward.1} parent=1 // pred_check
      _
    $region27: #{mlp_decoder_forward.1} parent=1 // pred_check_branch
      %40 = sbr.rel (0) target = $region29
    $region28: #{mlp_decoder_forward.1} parent=1 // pred_region
      _
    $region29: #{mlp_decoder_forward.1} parent=1 // pred_fallthru
      _
    // Predicated region
    $region30: #{mlp_decoder_forward.1} parent=1 // pred_check
      _
    $region31: #{mlp_decoder_forward.1} parent=1 // pred_check_branch
      %42 = sbr.rel (0) target = $region33
    $region32: #{mlp_decoder_forward.1} parent=1 // pred_region
      %44 = vsyncadd [#allocation5], 0
      %s45 = sshll.u32 %s7, 4
      %s46 = int_to_ptr.hbm [resolvable:$true] %s45
      %s47 = sshll.u32 [#allocation4], 4
      %s48 = int_to_ptr.vmem [resolvable:$true] %s47
      %53 = dma.hbm_to_vmem [thread:$0]  %s46, 2048, %s48, [#allocation5], 128, 128, 8
    $region33: #{mlp_decoder_forward.1} parent=1 // pred_fallthru
      _
    // Predicated region
    $region34: #{mlp_decoder_forward.1} parent=1 // pred_check
      _
    $region35: #{mlp_decoder_forward.1} parent=1 // pred_check_branch
      %55 = sbr.rel (0) target = $region37
    $region36: #{mlp_decoder_forward.1} parent=1 // pred_region
      _
    $region37: #{mlp_decoder_forward.1} parent=1 // pred_fallthru
      _
    // Predicated region
    $region38: #{mlp_decoder_forward.1} parent=1 // pred_check
      _
    $region39: #{mlp_decoder_forward.1} parent=1 // pred_check_branch
      %57 = sbr.rel (0) target = $region41
    $region40: #{mlp_decoder_forward.1} parent=1 // pred_region
      %59 = dma.done [#allocation3], 1024
    $region41: #{mlp_decoder_forward.1} parent=1 // pred_fallthru
      _
    // Predicated region
    $region42: #{mlp_decoder_forward.1} parent=1 // pred_check
      _
    $region43: #{mlp_decoder_forward.1} parent=1 // pred_check_branch
      %61 = sbr.rel (0) target = $region45
    $region44: #{mlp_decoder_forward.1} parent=1 // pred_region
      %63 = dma.done [#allocation5], 2048
    $region45: #{mlp_decoder_forward.1} parent=1 // pred_fallthru
      _
    %v65 = vld [vmem:[%s2] sm:$0xf]
    %v66 = vld [vmem:[%s2 + $0x4] sm:$0xf]
    %v67 = vld [vmem:[%s3] sm:$0xf]
    %v68 = vld [vmem:[%s3 + $0x4] sm:$0x1]
    %v69 = vld [vmem:[%s0] sm:$0xff]
    %v70 = vpack.c.bf16 %v69, %v69
    %v71 = vld [vmem:[%s1] sm:$0xff]
    %v72 = vpack.c.bf16 %v71, %v71
    %v75 = vunpack.c.l.b16 %v67
    %v76 = vunpack.c.l.b16 %v68
    %v77 = vpack.c.b16 %v76, %v75
    %vm78 = vcmask 80896
    %v80 = vsel %vm78, %v72, 0
    %vm82 = vcmask 1044480
    %v84 = vsel %vm82, %v77, 0
    %86 = vmatpush.bf16.msra.mxu0 0
    %87 = vmatpush.bf16.msra.mxu0 0
    %88 = vmatpush.bf16.msra.mxu0 0
    %89 = vmatpush.bf16.msra.mxu0 0
    %90 = vmatpush.bf16.msra.mxu0 0
    %91 = vmatpush.bf16.msra.mxu0 0
    %92 = vmatpush.bf16.msra.mxu0 0
    %93 = vmatpush.bf16.msra.mxu0 %v84
    %94 = vmatmul.bf16.gmra.mxu0 %v80
    %v95 = vpop.f32.mrf.mxu0
    %v96 = vadd.f32 0.0, %v95
    %v97 = vpop.f32.mrf.mxu0
    %98 = vdwg.mxu0
    %v101 = vunpack.c.l.b16 %v65
    %v102 = vunpack.c.l.b16 %v66
    %v103 = vpack.c.b16 %v102, %v101
    %vm105 = vcmask 130048
    %v107 = vsel %vm105, %v70, 0
    %109 = vmatpush.bf16.msra.mxu0 0
    %110 = vmatpush.bf16.msra.mxu0 0
    %111 = vmatpush.bf16.msra.mxu0 0
    %112 = vmatpush.bf16.msra.mxu0 0
    %113 = vmatpush.bf16.msra.mxu0 0
    %114 = vmatpush.bf16.msra.mxu0 0
    %115 = vmatpush.bf16.msra.mxu0 0
    %116 = vmatpush.bf16.msra.mxu0 %v103
    %117 = vmatmul.bf16.gmra.mxu0 %v107
    %v118 = vpop.f32.mrf.mxu0
    %v119 = vadd.f32 %v96, %v118
    %v120 = vpop.f32.mrf.mxu0
    %121 = vdwg.mxu0
    %v122 = vld [vmem:[%s4] sm:$0x1]
    %v124 = vperm.slane %v122, 0
    %v126 = vadd.f32 %v119, %v124
    %v127 = vxor.u32 %v126, 2147483648
    %v128 = vmul.f32 %v127, 1.442695
    %v129 = vpow.pop %v128
    %v130 = vadd.f32 %v129, 1.0
    %v131 = vrcp.pop %v130
    %v132 = vmul.f32 %v130, %v131
    %v133 = vsub.f32 1.0, %v132
    %v134 = vmul.f32 %v131, %v133
    %v135 = vadd.f32 %v131, %v134
    %vm136 = vweird.f32 %v130
    %vm137 = vweird.f32 %v131
    %vm138 = vmor %vm136, %vm137
    %v139 = vsel %vm138, %v131, %v135
    %v140 = vand.u32 2147483647, %v130
    %vm141 = vcmp.eq.f32.partialorder %v140, 8.507059e+37
    %v142 = vand.u32 %v130, 2147483648
    %v143 = vor.u32 1.1754944e-38, %v142
    %v144 = vsel %vm141, %v143, %v139
    %v145 = vmul.f32 1.0, %v144
    %v146 = vmul.f32 %v126, %v145
    %v147 = vld [vmem:[#allocation2] sm:$0xf]
    %v148 = vld [vmem:[#allocation2 + $0x4] sm:$0xf]
    %v149 = vld [vmem:[#allocation2 + $0x8] sm:$0xf]
    %v150 = vld [vmem:[#allocation2 + $0xc] sm:$0xf]
    %v151 = vld [vmem:[#allocation2 + $0x10] sm:$0xf]
    %v152 = vld [vmem:[#allocation2 + $0x14] sm:$0xf]
    %v153 = vld [vmem:[#allocation2 + $0x18] sm:$0xf]
    %v154 = vld [vmem:[#allocation2 + $0x1c] sm:$0xf]
    %v155 = vld [vmem:[#allocation2 + $0x20] sm:$0xf]
    %v156 = vld [vmem:[#allocation2 + $0x24] sm:$0xf]
    %v157 = vld [vmem:[#allocation2 + $0x28] sm:$0xf]
    %v158 = vld [vmem:[#allocation2 + $0x2c] sm:$0xf]
    %v159 = vld [vmem:[#allocation2 + $0x30] sm:$0xf]
    %v160 = vld [vmem:[#allocation2 + $0x34] sm:$0xf]
    %v161 = vld [vmem:[#allocation2 + $0x38] sm:$0xf]
    %v162 = vld [vmem:[#allocation2 + $0x3c] sm:$0xf]
    %v163 = vld [vmem:[%s6] sm:$0x1]
    %v164 = vpack.c.bf16 %v146, %v146
    %v166 = vperm.slane %v163, 0
    %v184 = vunpack.c.l.b16 %v147
    %v185 = vunpack.c.l.b16 %v148
    %v186 = vunpack.c.l.b16 %v149
    %v187 = vunpack.c.l.b16 %v150
    %v188 = vunpack.c.l.b16 %v151
    %v189 = vunpack.c.l.b16 %v152
    %v190 = vunpack.c.l.b16 %v153
    %v191 = vunpack.c.l.b16 %v154
    %v192 = vunpack.c.l.b16 %v155
    %v193 = vunpack.c.l.b16 %v156
    %v194 = vunpack.c.l.b16 %v157
    %v195 = vunpack.c.l.b16 %v158
    %v196 = vunpack.c.l.b16 %v159
    %v197 = vunpack.c.l.b16 %v160
    %v198 = vunpack.c.l.b16 %v161
    %v199 = vunpack.c.l.b16 %v162
    %v200 = vpack.c.b16 %v185, %v184
    %v201 = vpack.c.b16 %v187, %v186
    %v202 = vpack.c.b16 %v189, %v188
    %v203 = vpack.c.b16 %v191, %v190
    %v204 = vpack.c.b16 %v193, %v192
    %v205 = vpack.c.b16 %v195, %v194
    %v206 = vpack.c.b16 %v197, %v196
    %v207 = vpack.c.b16 %v199, %v198
    %216 = vmatpush.bf16.msra.mxu0 %v207
    %217 = vmatpush.bf16.msra.mxu0 %v206
    %218 = vmatpush.bf16.msra.mxu0 %v205
    %219 = vmatpush.bf16.msra.mxu0 %v204
    %220 = vmatpush.bf16.msra.mxu0 %v203
    %221 = vmatpush.bf16.msra.mxu0 %v202
    %222 = vmatpush.bf16.msra.mxu0 %v201
    %223 = vmatpush.bf16.msra.mxu0 %v200
    %224 = vmatmul.bf16.gmra.mxu0 %v164
    %v225 = vpop.f32.mrf.mxu0
    %v226 = vadd.f32 %v166, %v225
    %v227 = vpop.f32.mrf.mxu0
    %228 = vdwg.mxu0
    %v229 = vxor.u32 %v226, 2147483648
    %v230 = vmul.f32 %v229, 1.442695
    %v231 = vpow.pop %v230
    %v232 = vadd.f32 %v231, 1.0
    %v233 = vrcp.pop %v232
    %v234 = vmul.f32 %v232, %v233
    %v235 = vsub.f32 1.0, %v234
    %v236 = vmul.f32 %v233, %v235
    %v237 = vadd.f32 %v233, %v236
    %vm238 = vweird.f32 %v232
    %vm239 = vweird.f32 %v233
    %vm240 = vmor %vm238, %vm239
    %v241 = vsel %vm240, %v233, %v237
    %v242 = vand.u32 2147483647, %v232
    %vm243 = vcmp.eq.f32.partialorder %v242, 8.507059e+37
    %v244 = vand.u32 %v232, 2147483648
    %v245 = vor.u32 1.1754944e-38, %v244
    %v246 = vsel %vm243, %v245, %v241
    %v247 = vmul.f32 1.0, %v246
    %v248 = vmul.f32 %v226, %v247
    %v249 = vld [vmem:[#allocation4] sm:$0xff]
    %v250 = vld [vmem:[#allocation4 + $0x8] sm:$0xff]
    %v251 = vld [vmem:[#allocation4 + $0x10] sm:$0xff]
    %v252 = vld [vmem:[#allocation4 + $0x18] sm:$0xff]
    %v253 = vld [vmem:[#allocation4 + $0x20] sm:$0xff]
    %v254 = vld [vmem:[#allocation4 + $0x28] sm:$0xff]
    %v255 = vld [vmem:[#allocation4 + $0x30] sm:$0xff]
    %v256 = vld [vmem:[#allocation4 + $0x38] sm:$0xff]
    %v257 = vld [vmem:[#allocation4 + $0x40] sm:$0xff]
    %v258 = vld [vmem:[#allocation4 + $0x48] sm:$0xff]
    %v259 = vld [vmem:[#allocation4 + $0x50] sm:$0xff]
    %v260 = vld [vmem:[#allocation4 + $0x58] sm:$0xff]
    %v261 = vld [vmem:[#allocation4 + $0x60] sm:$0xff]
    %v262 = vld [vmem:[#allocation4 + $0x68] sm:$0xff]
    %v263 = vld [vmem:[#allocation4 + $0x70] sm:$0xff]
    %v264 = vld [vmem:[#allocation4 + $0x78] sm:$0xff]
    %v265 = vld [vmem:[%s8] sm:$0x3]
    %v266 = vpack.c.bf16 %v248, %v248
    %v268 = vperm.slane %v265, 0
    %v269 = vperm.slane %v265, 1
    %v288 = vunpack.c.l.b16 %v249
    %v289 = vunpack.c.h.b16 %v249
    %v290 = vunpack.c.l.b16 %v250
    %v291 = vunpack.c.h.b16 %v250
    %v292 = vunpack.c.l.b16 %v251
    %v293 = vunpack.c.h.b16 %v251
    %v294 = vunpack.c.l.b16 %v252
    %v295 = vunpack.c.h.b16 %v252
    %v296 = vunpack.c.l.b16 %v253
    %v297 = vunpack.c.h.b16 %v253
    %v298 = vunpack.c.l.b16 %v254
    %v299 = vunpack.c.h.b16 %v254
    %v300 = vunpack.c.l.b16 %v255
    %v301 = vunpack.c.h.b16 %v255
    %v302 = vunpack.c.l.b16 %v256
    %v303 = vunpack.c.h.b16 %v256
    %v304 = vunpack.c.l.b16 %v257
    %v305 = vunpack.c.h.b16 %v257
    %v306 = vunpack.c.l.b16 %v258
    %v307 = vunpack.c.h.b16 %v258
    %v308 = vunpack.c.l.b16 %v259
    %v309 = vunpack.c.h.b16 %v259
    %v310 = vunpack.c.l.b16 %v260
    %v311 = vunpack.c.h.b16 %v260
    %v312 = vunpack.c.l.b16 %v261
    %v313 = vunpack.c.h.b16 %v261
    %v314 = vunpack.c.l.b16 %v262
    %v315 = vunpack.c.h.b16 %v262
    %v316 = vunpack.c.l.b16 %v263
    %v317 = vunpack.c.h.b16 %v263
    %v318 = vunpack.c.l.b16 %v264
    %v319 = vunpack.c.h.b16 %v264
    %v320 = vpack.c.b16 %v290, %v288
    %v321 = vpack.c.b16 %v291, %v289
    %v322 = vpack.c.b16 %v294, %v292
    %v323 = vpack.c.b16 %v295, %v293
    %v324 = vpack.c.b16 %v298, %v296
    %v325 = vpack.c.b16 %v299, %v297
    %v326 = vpack.c.b16 %v302, %v300
    %v327 = vpack.c.b16 %v303, %v301
    %v328 = vpack.c.b16 %v306, %v304
    %v329 = vpack.c.b16 %v307, %v305
    %v330 = vpack.c.b16 %v310, %v308
    %v331 = vpack.c.b16 %v311, %v309
    %v332 = vpack.c.b16 %v314, %v312
    %v333 = vpack.c.b16 %v315, %v313
    %v334 = vpack.c.b16 %v318, %v316
    %v335 = vpack.c.b16 %v319, %v317
    %352 = vmatpush.bf16.msra.mxu0 %v334
    %353 = vmatpush.bf16.msra.mxu0 %v332
    %354 = vmatpush.bf16.msra.mxu0 %v330
    %355 = vmatpush.bf16.msra.mxu0 %v328
    %356 = vmatpush.bf16.msra.mxu0 %v326
    %357 = vmatpush.bf16.msra.mxu0 %v324
    %358 = vmatpush.bf16.msra.mxu0 %v322
    %359 = vmatpush.bf16.msra.mxu0 %v320
    %360 = vmatmul.bf16.gmra.mxu0 %v266
    %v361 = vpop.f32.mrf.mxu0
    %v362 = vadd.f32 %v268, %v361
    %v363 = vpop.f32.mrf.mxu0
    %364 = vdwg.mxu0
    %365 = vmatpush.bf16.msra.mxu0 %v335
    %366 = vmatpush.bf16.msra.mxu0 %v333
    %367 = vmatpush.bf16.msra.mxu0 %v331
    %368 = vmatpush.bf16.msra.mxu0 %v329
    %369 = vmatpush.bf16.msra.mxu0 %v327
    %370 = vmatpush.bf16.msra.mxu0 %v325
    %371 = vmatpush.bf16.msra.mxu0 %v323
    %372 = vmatpush.bf16.msra.mxu0 %v321
    %373 = vmatmul.bf16.gmra.mxu0 %v266
    %v374 = vpop.f32.mrf.mxu0
    %v375 = vadd.f32 %v269, %v374
    %v376 = vpop.f32.mrf.mxu0
    %377 = vdwg.mxu0
    %v378 = vxor.u32 %v362, 2147483648
    %v379 = vxor.u32 %v375, 2147483648
    %v380 = vmul.f32 %v378, 1.442695
    %v381 = vpow.pop %v380
    %v382 = vmul.f32 %v379, 1.442695
    %v383 = vpow.pop %v382
    %v384 = vadd.f32 %v381, 1.0
    %v385 = vadd.f32 %v383, 1.0
    %v386 = vrcp.pop %v384
    %v387 = vmul.f32 %v384, %v386
    %v388 = vsub.f32 1.0, %v387
    %v389 = vmul.f32 %v386, %v388
    %v390 = vadd.f32 %v386, %v389
    %vm391 = vweird.f32 %v384
    %vm392 = vweird.f32 %v386
    %vm393 = vmor %vm391, %vm392
    %v394 = vsel %vm393, %v386, %v390
    %v395 = vand.u32 2147483647, %v384
    %vm396 = vcmp.eq.f32.partialorder %v395, 8.507059e+37
    %v397 = vand.u32 %v384, 2147483648
    %v398 = vor.u32 1.1754944e-38, %v397
    %v399 = vsel %vm396, %v398, %v394
    %v400 = vmul.f32 1.0, %v399
    %v401 = vrcp.pop %v385
    %v402 = vmul.f32 %v385, %v401
    %v403 = vsub.f32 1.0, %v402
    %v404 = vmul.f32 %v401, %v403
    %v405 = vadd.f32 %v401, %v404
    %vm406 = vweird.f32 %v385
    %vm407 = vweird.f32 %v401
    %vm408 = vmor %vm406, %vm407
    %v409 = vsel %vm408, %v401, %v405
    %v410 = vand.u32 2147483647, %v385
    %vm411 = vcmp.eq.f32.partialorder %v410, 8.507059e+37
    %v412 = vand.u32 %v385, 2147483648
    %v413 = vor.u32 1.1754944e-38, %v412
    %v414 = vsel %vm411, %v413, %v409
    %v415 = vmul.f32 1.0, %v414
    %v416 = vmax.f32 %v400, 1e-06
    %v417 = vmax.f32 %v415, 1e-06
    %v418 = vmin.f32 %v416, 0.999999
    %v419 = vmin.f32 %v417, 0.999999
    %420 = vst [vmem:[%s9] sm:$0xff] %v418
    %421 = vst [vmem:[%s9 + $0x8] sm:$0xff] %v419
    // Predicated region
    $region46: #{mlp_decoder_forward.1} parent=1 // pred_check
      _
    $region47: #{mlp_decoder_forward.1} parent=1 // pred_check_branch
      %423 = sbr.rel (0) target = $region49
    $region48: #{mlp_decoder_forward.1} parent=1 // pred_region
      _
    $region49: #{mlp_decoder_forward.1} parent=1 // pred_fallthru
      _
    // Predicated region
    $region50: #{mlp_decoder_forward.1} parent=1 // pred_check
      _
    $region51: #{mlp_decoder_forward.1} parent=1 // pred_check_branch
      %425 = sbr.rel (0) target = $region53
    $region52: #{mlp_decoder_forward.1} parent=1 // pred_region
      _
    $region53: #{mlp_decoder_forward.1} parent=1 // pred_fallthru
      _
    %426 = vsyncpa [#allocation3], 1
    %427 = vsyncpa [#allocation5], 1

</llo_original>
